<compile_context>
chip_gen: v5e
topology: v5e:2x2
jax: 0.10.0
libtpu: 0.0.40
codegen_flags: <defaults>
</compile_context>

<pallas_src>
import jax
import jax.numpy as jnp
from jax import lax
from jax.experimental import pallas as pl
from jax.experimental.pallas import tpu as pltpu


def _mlp_kernel(x_ref, w_ref, q_ref, b_ref, h_ref, y_ref):
    x = x_ref[...]            # (D, tn)  bf16 (streamed tile)
    w = w_ref[...]            # (H, D)   bf16 (resident across grid)
    q = q_ref[...]            # (H, O)   bf16 (resident across grid)
    b = b_ref[...]            # (O, tn)  f32  (resident across grid)

    # First matmul on the MXU: bf16 inputs, f32 accumulation.
    a1 = jnp.dot(w, x, preferred_element_type=jnp.float32)          # (H, tn)
    h = jnp.maximum(a1, 0.0)                                         # ReLU, f32 on VPU

    # Second matmul: contract on H directly (no materialized Q^T / XLU transpose).
    a2 = lax.dot_general(
        q, h.astype(jnp.bfloat16),
        dimension_numbers=(((0,), (0,)), ((), ())),
        preferred_element_type=jnp.float32)                          # (O, tn)

    y = jax.nn.sigmoid(a2 + b)                                       # f32 epilogue, sigmoid on EUP

    h_ref[...] = h.astype(h_ref.dtype)
    y_ref[...] = y.astype(y_ref.dtype)


def mlp_forward(x, W, Q, b, *, tile_n_max=512):
    D, N = x.shape
    H, _ = W.shape
    _, O = Q.shape

    # Lane-dense layout: pad the sample axis N up to a multiple of 128 lanes,
    # then to a multiple of the chosen tile size.
    n_pad = pl.cdiv(N, 128) * 128
    tn = min(tile_n_max, n_pad)
    n_pad = pl.cdiv(n_pad, tn) * tn
    grid = (n_pad // tn,)

    x_p = x if n_pad == N else jnp.pad(x, ((0, 0), (0, n_pad - N)))

    # bf16 MXU operands (accumulation is f32 inside the kernel).
    x_bf = x_p.astype(jnp.bfloat16)
    w_bf = W.astype(jnp.bfloat16)
    q_bf = Q.astype(jnp.bfloat16)
    # Pre-broadcast bias once to (O, tn): the in-kernel add is a plain VPU add.
    b_bcast = jnp.broadcast_to(b.astype(jnp.float32), (O, tn))

    flops = 2 * H * D * n_pad + 2 * O * H * n_pad
    bytes_accessed = (x_bf.size * 2 + w_bf.size * 2 + q_bf.size * 2
                      + b_bcast.size * 4 + H * n_pad * 4 + O * n_pad * 4)

    h_p, y_p = pl.pallas_call(
        _mlp_kernel,
        out_shape=(jax.ShapeDtypeStruct((H, n_pad), jnp.float32),
                   jax.ShapeDtypeStruct((O, n_pad), jnp.float32)),
        grid=grid,
        in_specs=[
            pl.BlockSpec((D, tn), lambda j: (0, j)),   # x: streamed over N tiles
            pl.BlockSpec((H, D), lambda j: (0, 0)),    # W: resident in VMEM
            pl.BlockSpec((H, O), lambda j: (0, 0)),    # Q: resident in VMEM
            pl.BlockSpec((O, tn), lambda j: (0, 0)),   # b (pre-broadcast): resident
        ],
        out_specs=(
            pl.BlockSpec((H, tn), lambda j: (0, j)),   # h
            pl.BlockSpec((O, tn), lambda j: (0, j)),   # y
        ),
        compiler_params=pltpu.CompilerParams(
            dimension_semantics=("parallel",),
            vmem_limit_bytes=32 * 1024 * 1024),
        cost_estimate=pl.CostEstimate(
            flops=flops,
            transcendentals=O * n_pad,
            bytes_accessed=bytes_accessed),
    )(x_bf, w_bf, q_bf, b_bcast)

    if n_pad != N:
        h_p = h_p[:, :N]
        y_p = y_p[:, :N]
    return h_p, y_p


if __name__ == "__main__":
    # Small deterministic shapes consistent with the module:
    # D=32 input dim, H=32 hidden, O=16 output, N=8 samples.
    D, H, O, N = 32, 32, 16, 8
    key = jax.random.PRNGKey(0)
    kx, kw, kq, kb = jax.random.split(key, 4)

    x = jax.random.normal(kx, (D, N), dtype=jnp.float32)
    W = jax.random.normal(kw, (H, D), dtype=jnp.float32) * 0.1
    Q = jax.random.normal(kq, (H, O), dtype=jnp.float32) * 0.1
    b = jax.random.normal(kb, (O, 1), dtype=jnp.float32)

    h, y = mlp_forward(x, W, Q, b)
    jax.block_until_ready((h, y))

    # Reference check in plain JAX (f32).  bf16 MXU operands => looser tolerance.
    h_ref = jnp.maximum(W @ x, 0.0)
    y_ref = jax.nn.sigmoid(Q.T @ h_ref + b)
    assert h.shape == (H, N) and y.shape == (O, N)
    assert jnp.allclose(h, h_ref, atol=2e-2, rtol=2e-2), "h mismatch"
    assert jnp.allclose(y, y_ref, atol=2e-2, rtol=2e-2), "y mismatch"

    print("KERNEL_OK")
</pallas_src>

<mosaic_0001>
module attributes {stable_mosaic.version = 11 : i64} {
  func.func @_mlp_kernel(%arg0: i32, %arg1: memref<32x128xbf16, #tpu.memory_space<vmem>>, %arg2: memref<32x32xbf16, #tpu.memory_space<vmem>>, %arg3: memref<32x16xbf16, #tpu.memory_space<vmem>>, %arg4: memref<16x128xf32, #tpu.memory_space<vmem>>, %arg5: memref<32x128xf32, #tpu.memory_space<vmem>>, %arg6: memref<16x128xf32, #tpu.memory_space<vmem>>) attributes {dimension_semantics = [#tpu.dimension_semantics<parallel>], iteration_bounds = array<i64: 1>, scalar_prefetch = 0 : i64, scratch_operands = 0 : i64, tpu.core_type = #tpu.core_type<tc>, window_params = [{transform_indices = @transform_0, window_bounds = array<i64: 32, 128>}, {pipeline_mode = #tpu.pipeline_mode<synchronous>, transform_indices = @transform_1, window_bounds = array<i64: 32, 32>}, {pipeline_mode = #tpu.pipeline_mode<synchronous>, transform_indices = @transform_2, window_bounds = array<i64: 32, 16>}, {pipeline_mode = #tpu.pipeline_mode<synchronous>, transform_indices = @transform_3, window_bounds = array<i64: 16, 128>}, {transform_indices = @transform_4, window_bounds = array<i64: 32, 128>}, {transform_indices = @transform_5, window_bounds = array<i64: 16, 128>}]} {
    %c0 = arith.constant 0 : index
    %c0_0 = arith.constant 0 : index
    %0 = vector.load %arg1[%c0, %c0_0] : memref<32x128xbf16, #tpu.memory_space<vmem>>, vector<32x128xbf16>
    %c0_1 = arith.constant 0 : index
    %c0_2 = arith.constant 0 : index
    %1 = vector.load %arg2[%c0_1, %c0_2] : memref<32x32xbf16, #tpu.memory_space<vmem>>, vector<32x32xbf16>
    %c0_3 = arith.constant 0 : index
    %c0_4 = arith.constant 0 : index
    %2 = vector.load %arg3[%c0_3, %c0_4] : memref<32x16xbf16, #tpu.memory_space<vmem>>, vector<32x16xbf16>
    %c0_5 = arith.constant 0 : index
    %c0_6 = arith.constant 0 : index
    %3 = vector.load %arg4[%c0_5, %c0_6] : memref<16x128xf32, #tpu.memory_space<vmem>>, vector<16x128xf32>
    %cst = arith.constant dense<0.000000e+00> : vector<32x128xf32>
    %4 = tpu.matmul %1, %0, %cst {dimension_numbers = #tpu.dot_dimension_numbers<[1], [0], [0], [1], [0, 0, 1, 1], [], []>} : vector<32x32xbf16>, vector<32x128xbf16>, vector<32x128xf32> -> vector<32x128xf32>
    %cst_7 = arith.constant 0.000000e+00 : f32
    %5 = vector.broadcast %cst_7 : f32 to vector<32x128xf32>
    %6 = arith.maximumf %4, %5 : vector<32x128xf32>
    %7 = arith.truncf %6 : vector<32x128xf32> to vector<32x128xbf16>
    %cst_8 = arith.constant dense<0.000000e+00> : vector<16x128xf32>
    %8 = tpu.matmul %2, %7, %cst_8 {dimension_numbers = #tpu.dot_dimension_numbers<[0], [0], [1], [1], [0, 1, 1, 1], [], []>} : vector<32x16xbf16>, vector<32x128xbf16>, vector<16x128xf32> -> vector<16x128xf32>
    %9 = arith.addf %8, %3 : vector<16x128xf32>
    %10 = arith.negf %9 : vector<16x128xf32>
    %11 = math.exp %10 : vector<16x128xf32>
    %cst_9 = arith.constant 1.000000e+00 : f32
    %12 = vector.broadcast %cst_9 : f32 to vector<16x128xf32>
    %13 = arith.addf %12, %11 : vector<16x128xf32>
    %14 = arith.divf %12, %13 : vector<16x128xf32>
    %c0_10 = arith.constant 0 : index
    %c0_11 = arith.constant 0 : index
    %15 = vector.load %arg5[%c0_10, %c0_11] : memref<32x128xf32, #tpu.memory_space<vmem>>, vector<32x128xf32>
    tpu.vector_store %arg5[%c0_10, %c0_11], %6 {strides = array<i32>} : memref<32x128xf32, #tpu.memory_space<vmem>>, vector<32x128xf32>,
    %c0_12 = arith.constant 0 : index
    %c0_13 = arith.constant 0 : index
    %16 = vector.load %arg6[%c0_12, %c0_13] : memref<16x128xf32, #tpu.memory_space<vmem>>, vector<16x128xf32>
    tpu.vector_store %arg6[%c0_12, %c0_13], %14 {strides = array<i32>} : memref<16x128xf32, #tpu.memory_space<vmem>>, vector<16x128xf32>,
    return
  }
  func.func @transform_0(%arg0: i32) -> (i32, i32) {
    %c0_i32 = arith.constant 0 : i32
    %c0_i32_0 = arith.constant 0 : i32
    return %c0_i32, %arg0 : i32, i32
  }
  func.func @transform_1(%arg0: i32) -> (i32, i32) {
    %c0_i32 = arith.constant 0 : i32
    %c0_i32_0 = arith.constant 0 : i32
    %c0_i32_1 = arith.constant 0 : i32
    return %c0_i32, %c0_i32_0 : i32, i32
  }
  func.func @transform_2(%arg0: i32) -> (i32, i32) {
    %c0_i32 = arith.constant 0 : i32
    %c0_i32_0 = arith.constant 0 : i32
    %c0_i32_1 = arith.constant 0 : i32
    return %c0_i32, %c0_i32_0 : i32, i32
  }
  func.func @transform_3(%arg0: i32) -> (i32, i32) {
    %c0_i32 = arith.constant 0 : i32
    %c0_i32_0 = arith.constant 0 : i32
    %c0_i32_1 = arith.constant 0 : i32
    return %c0_i32, %c0_i32_0 : i32, i32
  }
  func.func @transform_4(%arg0: i32) -> (i32, i32) {
    %c0_i32 = arith.constant 0 : i32
    %c0_i32_0 = arith.constant 0 : i32
    return %c0_i32, %arg0 : i32, i32
  }
  func.func @transform_5(%arg0: i32) -> (i32, i32) {
    %c0_i32 = arith.constant 0 : i32
    %c0_i32_0 = arith.constant 0 : i32
    return %c0_i32, %arg0 : i32, i32
  }
}

</mosaic_0001>

<llo_original>
// kernel: tpu_custom_call.1
$region0: #{tpu_custom_call.1}
  #allocation0 [shape = 'u32[]', space=smem, size = 0x4, offset = 0x4, fixed_abs, tag = 'smem constant byte address 0x4 - core index']
  #allocation1 [shape = 'u32[72,128]{1,0:T(1,128)}', space=vmem, size = 0x9000, scoped, tag = 'internal scratch']
  %s0 = inlined_call_operand.vmem [shape: bf16[32,128], index: 0, kind: input, shape index: {}]
  %s1 = inlined_call_operand.hbm [shape: bf16[32,32], index: 1, kind: input, shape index: {}]
  %s2 = inlined_call_operand.vmem [shape: bf16[32,16], index: 2, kind: input, shape index: {}]
  %s3 = inlined_call_operand.hbm [shape: f32[16,128], index: 3, kind: input, shape index: {}]
  %s4 = inlined_call_operand.hbm [shape: f32[32,128], index: 4, kind: output, shape index: {0}]
  %s5 = inlined_call_operand.hbm [shape: f32[16,128], index: 5, kind: output, shape index: {1}]
  %6 = xla_tuple %s4, %s5
  %s7 = sld [smem:[#allocation0]]
  $region42: #{tpu_custom_call.1} parent=0
    _
  %s9 = ssub.s32 1, %s7
  %s10 = scalar_select 0, %s9, %s7
  $region1: #{tpu_custom_call.1} parent=0
    #allocation2 [shape = 'u8[8192]{0}', space=vmem, size = 0x2000, scoped, tag = 'input window, operand 1, single buffered']
    #allocation3 [shape = 's32[1]{0}', space=sflag, size = 0x4, scoped, tag = 'scoped memory for tpu_custom_call.1']
    #allocation4 [shape = 's32[1]{0}', space=sflag, size = 0x4, scoped, tag = 'scoped memory for tpu_custom_call.1']
    #allocation5 [shape = 'u8[8192]{0}', space=vmem, size = 0x2000, scoped, tag = 'input window, operand 3, single buffered']
    #allocation6 [shape = 's32[1]{0}', space=sflag, size = 0x4, scoped, tag = 'scoped memory for tpu_custom_call.1']
    #allocation7 [shape = 'u8[16384]{0}', space=vmem, size = 0x4000, scoped, tag = 'output window, operand 0, single buffered']
    #allocation8 [shape = 'u8[8192]{0}', space=vmem, size = 0x2000, scoped, tag = 'output window, operand 1, single buffered']
    #allocation9 [shape = 's32[1]{0}', space=sflag, size = 0x4, scoped, tag = 'scoped memory for tpu_custom_call.1']
    %11 = vsyncpa [#allocation3], 0
    %12 = vsyncpa [#allocation6], 0
    %13 = vsyncpa [#allocation4], 0
    %14 = vsyncpa [#allocation9], 0
    // Predicated region
    $region2: #{tpu_custom_call.1} parent=1 // pred_check
      _
    $region3: #{tpu_custom_call.1} parent=1 // pred_check_branch
      %16 = sbr.rel (0) target = $region5
    $region4: #{tpu_custom_call.1} parent=1 // pred_region
      _
    $region5: #{tpu_custom_call.1} parent=1 // pred_fallthru
      _
    // Predicated region
    $region6: #{tpu_custom_call.1} parent=1 // pred_check
      _
    $region7: #{tpu_custom_call.1} parent=1 // pred_check_branch
      %18 = sbr.rel (0) target = $region9
    $region8: #{tpu_custom_call.1} parent=1 // pred_region
      %20 = vsyncadd [#allocation3], 0
      %s21 = sshll.u32 %s1, 4
      %s22 = int_to_ptr.hbm [resolvable:$true] %s21
      %s23 = sshll.u32 [#allocation2], 4
      %s24 = int_to_ptr.vmem [resolvable:$true] %s23
      %29 = dma.hbm_to_vmem [thread:$0]  %s22, 256, %s24, [#allocation3], 64, 64, 4
    $region9: #{tpu_custom_call.1} parent=1 // pred_fallthru
      _
    // Predicated region
    $region10: #{tpu_custom_call.1} parent=1 // pred_check
      _
    $region11: #{tpu_custom_call.1} parent=1 // pred_check_branch
      %31 = sbr.rel (0) target = $region13
    $region12: #{tpu_custom_call.1} parent=1 // pred_region
      _
    $region13: #{tpu_custom_call.1} parent=1 // pred_fallthru
      _
    // Predicated region
    $region14: #{tpu_custom_call.1} parent=1 // pred_check
      _
    $region15: #{tpu_custom_call.1} parent=1 // pred_check_branch
      %33 = sbr.rel (0) target = $region17
    $region16: #{tpu_custom_call.1} parent=1 // pred_region
      %35 = vsyncadd [#allocation6], 0
      %s36 = sshll.u32 %s3, 4
      %s37 = int_to_ptr.hbm [resolvable:$true] %s36
      %s38 = sshll.u32 [#allocation5], 4
      %s39 = int_to_ptr.vmem [resolvable:$true] %s38
      %44 = dma.hbm_to_vmem [thread:$0]  %s37, 256, %s39, [#allocation6], 128, 128, 8
    $region17: #{tpu_custom_call.1} parent=1 // pred_fallthru
      _
    // Predicated region
    $region18: #{tpu_custom_call.1} parent=1 // pred_check
      _
    $region19: #{tpu_custom_call.1} parent=1 // pred_check_branch
      %46 = sbr.rel (0) target = $region21
    $region20: #{tpu_custom_call.1} parent=1 // pred_region
      %48 = dma.done [#allocation3], 256
    $region21: #{tpu_custom_call.1} parent=1 // pred_fallthru
      _
    // Predicated region
    $region22: #{tpu_custom_call.1} parent=1 // pred_check
      _
    $region23: #{tpu_custom_call.1} parent=1 // pred_check_branch
      %50 = sbr.rel (0) target = $region25
    $region24: #{tpu_custom_call.1} parent=1 // pred_region
      %52 = dma.done [#allocation6], 256
    $region25: #{tpu_custom_call.1} parent=1 // pred_fallthru
      _
    %v54 = vld [vmem:[%s0] sm:$0xf]
    %v55 = vld [vmem:[%s0 + $0x4] sm:$0xf]
    %v56 = vld [vmem:[%s0 + $0x8] sm:$0xf]
    %v57 = vld [vmem:[%s0 + $0xc] sm:$0xf]
    %v58 = vld [vmem:[#allocation2] sm:$0xf]
    %v59 = vld [vmem:[#allocation2 + $0x4] sm:$0xf]
    %v60 = vld [vmem:[#allocation2 + $0x8] sm:$0xf]
    %v61 = vld [vmem:[#allocation2 + $0xc] sm:$0xf]
    %v62 = vld [vmem:[%s2] sm:$0xf]
    %v63 = vld [vmem:[%s2 + $0x4] sm:$0xf]
    %v64 = vld [vmem:[%s2 + $0x8] sm:$0xf]
    %v65 = vld [vmem:[%s2 + $0xc] sm:$0xf]
    %v66 = vld [vmem:[#allocation5] sm:$0xff]
    %v67 = vld [vmem:[#allocation5 + $0x8] sm:$0xff]
    %v72 = vunpack.c.l.b16 %v58
    %v73 = vunpack.c.l.b16 %v59
    %v74 = vunpack.c.l.b16 %v60
    %v75 = vunpack.c.l.b16 %v61
    %v76 = vpack.c.b16 %v73, %v72
    %v77 = vpack.c.b16 %v75, %v74
    %v82 = vunpack.c.l.b16 %v54
    %v83 = vunpack.c.l.b16 %v55
    %v84 = vunpack.c.l.b16 %v56
    %v85 = vunpack.c.l.b16 %v57
    %v86 = vpack.c.b16 %v83, %v82
    %v87 = vpack.c.b16 %v85, %v84
    %vm90 = vcmask 261120
    %v92 = vsel %vm90, %v76, 0
    %v95 = vsel %vm90, %v77, 0
    %97 = vmatpush.bf16.msra.mxu0 0
    %98 = vmatpush.bf16.msra.mxu0 0
    %99 = vmatpush.bf16.msra.mxu0 0
    %100 = vmatpush.bf16.msra.mxu0 0
    %101 = vmatpush.bf16.msra.mxu0 0
    %102 = vmatpush.bf16.msra.mxu0 0
    %103 = vmatpush.bf16.msra.mxu0 %v87
    %104 = vmatpush.bf16.msra.mxu0 %v86
    %105 = vmatmul.bf16.gmra.mxu0 %v92
    %v106 = vpop.f32.mrf.mxu0
    %v107 = vadd.f32 0.0, %v106
    %v108 = vpop.f32.mrf.mxu0
    %v109 = vadd.f32 0.0, %v108
    %110 = vmatmul.bf16.gmra.mxu0 %v95
    %v111 = vpop.f32.mrf.mxu0
    %v112 = vadd.f32 0.0, %v111
    %v113 = vpop.f32.mrf.mxu0
    %v114 = vadd.f32 0.0, %v113
    %115 = vdwg.mxu0
    %v116 = vmax.f32 %v107, 0.0
    %v117 = vmax.f32 %v109, 0.0
    %v118 = vmax.f32 %v112, 0.0
    %v119 = vmax.f32 %v114, 0.0
    %v120 = vpack.c.bf16 %v117, %v116
    %v121 = vpack.c.bf16 %v119, %v118
    %v126 = vunpack.c.l.b16 %v62
    %v127 = vunpack.c.l.b16 %v63
    %v128 = vunpack.c.l.b16 %v64
    %v129 = vunpack.c.l.b16 %v65
    %v130 = vpack.c.b16 %v127, %v126
    %v131 = vpack.c.b16 %v129, %v128
    %134 = vxpose.xlu0.c.b16.start [1/8] %v130, 128
    %135 = vxpose.xlu0.c.b16.cont [2/8] %v131, 128
    %136 = vxpose.xlu0.c.b16.cont [3/8] 0, 128
    %137 = vxpose.xlu0.c.b16.cont [4/8] 0, 128
    %138 = vxpose.xlu0.c.b16.cont [5/8] 0, 128
    %139 = vxpose.xlu0.c.b16.cont [6/8] 0, 128
    %140 = vxpose.xlu0.c.b16.cont [7/8] 0, 128
    %141 = vxpose.xlu0.c.b16.end [8/8] 0, 128
    %v142 = vpop.trf.xlu0
    %v143 = vpop.trf.xlu0
    %v144 = vpop.trf.xlu0
    %v145 = vpop.trf.xlu0
    %v146 = vpop.trf.xlu0
    %v147 = vpop.trf.xlu0
    %v148 = vpop.trf.xlu0
    %v149 = vpop.trf.xlu0
    %v151 = vsel %vm90, %v142, 0
    %153 = vmatpush.bf16.msra.mxu0 0
    %154 = vmatpush.bf16.msra.mxu0 0
    %155 = vmatpush.bf16.msra.mxu0 0
    %156 = vmatpush.bf16.msra.mxu0 0
    %157 = vmatpush.bf16.msra.mxu0 0
    %158 = vmatpush.bf16.msra.mxu0 0
    %159 = vmatpush.bf16.msra.mxu0 %v121
    %160 = vmatpush.bf16.msra.mxu0 %v120
    %161 = vmatmul.bf16.gmra.mxu0 %v151
    %v162 = vpop.f32.mrf.mxu0
    %v163 = vadd.f32 %v66, %v162
    %v164 = vpop.f32.mrf.mxu0
    %v165 = vadd.f32 %v67, %v164
    %166 = vdwg.mxu0
    %v167 = vxor.u32 %v163, 2147483648
    %v168 = vxor.u32 %v165, 2147483648
    %v169 = vmul.f32 %v167, 1.442695
    %v170 = vpow.pop %v169
    %v171 = vmul.f32 %v168, 1.442695
    %v172 = vpow.pop %v171
    %v173 = vadd.f32 %v170, 1.0
    %v174 = vadd.f32 %v172, 1.0
    %v175 = vrcp.pop %v173
    %v176 = vmul.f32 %v173, %v175
    %v177 = vsub.f32 1.0, %v176
    %v178 = vmul.f32 %v175, %v177
    %v179 = vadd.f32 %v175, %v178
    %vm180 = vweird.f32 %v173
    %vm181 = vweird.f32 %v175
    %vm182 = vmor %vm180, %vm181
    %v183 = vsel %vm182, %v175, %v179
    %v184 = vand.u32 2147483647, %v173
    %vm185 = vcmp.eq.f32.partialorder %v184, 8.507059e+37
    %v186 = vand.u32 %v173, 2147483648
    %v187 = vor.u32 1.1754944e-38, %v186
    %v188 = vsel %vm185, %v187, %v183
    %v189 = vmul.f32 1.0, %v188
    %v190 = vrcp.pop %v174
    %v191 = vmul.f32 %v174, %v190
    %v192 = vsub.f32 1.0, %v191
    %v193 = vmul.f32 %v190, %v192
    %v194 = vadd.f32 %v190, %v193
    %vm195 = vweird.f32 %v174
    %vm196 = vweird.f32 %v190
    %vm197 = vmor %vm195, %vm196
    %v198 = vsel %vm197, %v190, %v194
    %v199 = vand.u32 2147483647, %v174
    %vm200 = vcmp.eq.f32.partialorder %v199, 8.507059e+37
    %v201 = vand.u32 %v174, 2147483648
    %v202 = vor.u32 1.1754944e-38, %v201
    %v203 = vsel %vm200, %v202, %v198
    %v204 = vmul.f32 1.0, %v203
    %205 = vst [vmem:[#allocation7] sm:$0xff] %v116
    %206 = vst [vmem:[#allocation7 + $0x8] sm:$0xff] %v117
    %207 = vst [vmem:[#allocation7 + $0x10] sm:$0xff] %v118
    %208 = vst [vmem:[#allocation7 + $0x18] sm:$0xff] %v119
    %209 = vst [vmem:[#allocation8] sm:$0xff] %v189
    %210 = vst [vmem:[#allocation8 + $0x8] sm:$0xff] %v204
    // Predicated region
    $region26: #{tpu_custom_call.1} parent=1 // pred_check
      _
    $region27: #{tpu_custom_call.1} parent=1 // pred_check_branch
      %212 = sbr.rel (0) target = $region29
    $region28: #{tpu_custom_call.1} parent=1 // pred_region
      %214 = vsyncadd [#allocation4], 0
      %s215 = sshll.u32 [#allocation7], 4
      %s216 = int_to_ptr.vmem [resolvable:$true] %s215
      %s217 = sshll.u32 %s4, 4
      %s218 = int_to_ptr.hbm [resolvable:$true] %s217
      %223 = dma.vmem_to_hbm [thread:$0]  %s216, 512, %s218, [#allocation4], 128, 128, 8
    $region29: #{tpu_custom_call.1} parent=1 // pred_fallthru
      _
    // Predicated region
    $region30: #{tpu_custom_call.1} parent=1 // pred_check
      _
    $region31: #{tpu_custom_call.1} parent=1 // pred_check_branch
      %225 = sbr.rel (0) target = $region33
    $region32: #{tpu_custom_call.1} parent=1 // pred_region
      %227 = vsyncadd [#allocation9], 0
      %s228 = sshll.u32 [#allocation8], 4
      %s229 = int_to_ptr.vmem [resolvable:$true] %s228
      %s230 = sshll.u32 %s5, 4
      %s231 = int_to_ptr.hbm [resolvable:$true] %s230
      %236 = dma.vmem_to_hbm [thread:$0]  %s229, 256, %s231, [#allocation9], 128, 128, 8
    $region33: #{tpu_custom_call.1} parent=1 // pred_fallthru
      _
    // Predicated region
    $region34: #{tpu_custom_call.1} parent=1 // pred_check
      _
    $region35: #{tpu_custom_call.1} parent=1 // pred_check_branch
      %238 = sbr.rel (0) target = $region37
    $region36: #{tpu_custom_call.1} parent=1 // pred_region
      %240 = dma.done [#allocation4], 512
    $region37: #{tpu_custom_call.1} parent=1 // pred_fallthru
      _
    // Predicated region
    $region38: #{tpu_custom_call.1} parent=1 // pred_check
      _
    $region39: #{tpu_custom_call.1} parent=1 // pred_check_branch
      %242 = sbr.rel (0) target = $region41
    $region40: #{tpu_custom_call.1} parent=1 // pred_region
      %244 = dma.done [#allocation9], 256
    $region41: #{tpu_custom_call.1} parent=1 // pred_fallthru
      _
    %245 = vsyncpa [#allocation3], 1
    %246 = vsyncpa [#allocation6], 1
    %247 = vsyncpa [#allocation4], 1
    %248 = vsyncpa [#allocation9], 1

</llo_original>
